<compile_context>
chip_gen: v6e
topology: v6e:2x2x1
jax: 0.10.0
libtpu: 0.0.40
codegen_flags: <defaults>
</compile_context>

<pallas_src>
import math

import jax
import jax.numpy as jnp
from jax.experimental import pallas as pl
from jax.experimental.pallas import tpu as pltpu


# ---------------------------------------------------------------------------
# ada: Hermite-function system (the canonical `ada` used with VPNet).
# Returns phi of shape (n_in, n_out). dphi / ind feed only the custom backward.
# ---------------------------------------------------------------------------
def ada_hermite(n_in, n_out, params, dtype=jnp.float32):
    dilation, translation = params[0], params[1]
    mid = (n_in - 1) / 2.0
    t = dilation * (jnp.arange(n_in, dtype=dtype) - mid) - translation
    w = jnp.exp(-0.5 * t * t)

    cols = []
    H_prev = jnp.ones_like(t)              # H_0
    norm = math.pi ** 0.25                 # ||H_0 e^{-t^2/2}||
    cols.append(H_prev * w / norm)
    if n_out > 1:
        H_cur = 2.0 * t                    # H_1
        norm *= math.sqrt(2.0)             # norm_k = norm_{k-1} * sqrt(2k)
        cols.append(H_cur * w / norm)
        for k in range(2, n_out):
            H_next = 2.0 * t * H_cur - 2.0 * (k - 1) * H_prev
            H_prev, H_cur = H_cur, H_next
            norm *= math.sqrt(2.0 * k)
            cols.append(H_cur * w / norm)
    # TODO(synk): reference ada assumes dilation > 0 (sqrt(dilation) is NaN otherwise).
    phi = jnp.stack(cols, axis=1) * jnp.sqrt(dilation)     # (n_in, n_out)
    return phi.astype(dtype)


def _pinv_full_rank(phi):
    """Moore-Penrose pinv of a full-column-rank phi via QR: R^{-1} Q^T."""
    q, r = jnp.linalg.qr(phi, mode="reduced")               # (n_in, n_out), (n_out, n_out)
    return jax.scipy.linalg.solve_triangular(r, q.T, lower=False)   # (n_out, n_in)


def _round_up(a, b):
    return (a + b - 1) // b * b


# ---------------------------------------------------------------------------
# Pallas kernel: one packed row-tile of the projection.
#   x_ref: (TM, k*n_in)    packed rows (k consecutive signals per row)
#   w_ref: (k*n_in, k*n_out) block-diagonal phip^T (full array, reused)
#   o_ref: (TM, k*n_out)   packed coefficients, row-major
# ---------------------------------------------------------------------------
def _vp_coeffs_kernel(x_ref, w_ref, o_ref):
    o_ref[...] = jnp.dot(
        x_ref[...], w_ref[...], preferred_element_type=jnp.float32
    ).astype(o_ref.dtype)


def vp_layer_coeffs_forward(x, weight, n_in, n_out):
    """x: (batch, channels, n_in); weight: (nparams,) = [dilation, translation]."""
    B, C, _ = x.shape
    rows = B * C

    # --- basis + pseudo-inverse (tiny n_in x n_out problem -> JAX glue, f32) ---
    phi = ada_hermite(n_in, n_out, weight.astype(jnp.float32), dtype=jnp.float32)
    phip = _pinv_full_rank(phi)                              # (n_out, n_in), f32

    # --- packed lane-dense layout: k consecutive signals per row -------------
    k = 128 // n_in if (n_in <= 128 and 128 % n_in == 0) else 1

    x2 = x.reshape(rows, n_in)
    rows_pad = _round_up(rows, k)
    if rows_pad != rows:
        # Only when rows % k != 0: pads at most k-1 rows.
        x2 = jnp.pad(x2, ((0, rows_pad - rows), (0, 0)))
    rows_pk = rows_pad // k
    xp = x2.reshape(rows_pk, k * n_in)                       # free contiguous reshape

    # Block-diagonal phip^T so that packed_row @ W = [x_0 @ phip^T | ... | x_{k-1} @ phip^T]
    W = jnp.kron(jnp.eye(k, dtype=jnp.float32), phip.T).astype(x.dtype)

    # --- row-tile selection: ~2 MiB of x per step, >=2 steps when enough work --
    itemsize = jnp.dtype(x.dtype).itemsize
    tile_target = _round_up(max(8, (2 * 1024 * 1024) // (k * n_in * itemsize)), 8)
    if rows_pk <= tile_target:
        if rows_pk >= 1024:
            # Keep >= 2 grid steps so v7x's two TensorCores both get work.
            TM = _round_up(pl.cdiv(rows_pk, 2), 8)
        else:
            TM = rows_pk                                     # single full-extent block
    else:
        TM = tile_target

    grid = (pl.cdiv(rows_pk, TM),)
    outp = pl.pallas_call(
        _vp_coeffs_kernel,
        out_shape=jax.ShapeDtypeStruct((rows_pk, k * n_out), x.dtype),
        grid=grid,
        in_specs=[
            pl.BlockSpec((TM, k * n_in), lambda r: (r, 0)),        # packed x tile
            pl.BlockSpec((k * n_in, k * n_out), lambda r: (0, 0)),  # full W, reused
        ],
        out_specs=pl.BlockSpec((TM, k * n_out), lambda r: (r, 0)),  # row-major packed
        compiler_params=pltpu.CompilerParams(
            dimension_semantics=("parallel",)),
    )(xp, W)

    # Packed (rows_pk, k*n_out) unpacks to (rows_pad, n_out) with a free reshape.
    out = outp.reshape(rows_pad, n_out)[:rows].reshape(B, C, n_out)
    return out


if __name__ == "__main__":
    # Small shapes consistent with the module: n_in signal length, n_out basis size.
    batch, channels, n_in, n_out = 2, 4, 16, 8

    key = jax.random.PRNGKey(0)
    x = jax.random.normal(key, (batch, channels, n_in), dtype=jnp.float32)
    weight = jnp.array([0.1, 0.0], dtype=jnp.float32)        # module init = [0.1, 0.0]

    coeffs = jax.block_until_ready(vp_layer_coeffs_forward(x, weight, n_in, n_out))

    # Pure-JAX reference of the same forward math: out[b,c,:] = phip @ x[b,c,:].
    phi_ref = ada_hermite(n_in, n_out, weight, dtype=jnp.float32)
    phip_ref = _pinv_full_rank(phi_ref)
    ref = jnp.einsum("bci,oi->bco", x, phip_ref).astype(x.dtype)

    assert coeffs.shape == (batch, channels, n_out)
    assert bool(jnp.allclose(coeffs, ref, atol=1e-4, rtol=1e-4))

    # TODO(synk): vpfun_coeffs.backward (VP Jacobian w.r.t. params) is autograd-only
    # and not part of the forward pass; not implemented here.
    print("KERNEL_OK")
</pallas_src>

<mosaic_0001>
module attributes {stable_mosaic.version = 11 : i64} {
  func.func @_vp_coeffs_kernel(%arg0: i32, %arg1: memref<1x128xf32, #tpu.memory_space<vmem>>, %arg2: memref<128x64xf32, #tpu.memory_space<vmem>>, %arg3: memref<1x64xf32, #tpu.memory_space<vmem>>) attributes {dimension_semantics = [#tpu.dimension_semantics<parallel>], iteration_bounds = array<i64: 1>, scalar_prefetch = 0 : i64, scratch_operands = 0 : i64, tpu.core_type = #tpu.core_type<tc>, window_params = [{transform_indices = @transform_0, window_bounds = array<i64: 1, 128>}, {pipeline_mode = #tpu.pipeline_mode<synchronous>, transform_indices = @transform_1, window_bounds = array<i64: 128, 64>}, {transform_indices = @transform_2, window_bounds = array<i64: 1, 64>}]} {
    %c0 = arith.constant 0 : index
    %c0_0 = arith.constant 0 : index
    %0 = vector.load %arg1[%c0, %c0_0] : memref<1x128xf32, #tpu.memory_space<vmem>>, vector<1x128xf32>
    %c0_1 = arith.constant 0 : index
    %c0_2 = arith.constant 0 : index
    %1 = vector.load %arg2[%c0_1, %c0_2] : memref<128x64xf32, #tpu.memory_space<vmem>>, vector<128x64xf32>
    %cst = arith.constant dense<0.000000e+00> : vector<1x64xf32>
    %2 = tpu.matmul %0, %1, %cst {dimension_numbers = #tpu.dot_dimension_numbers<[1], [0], [0], [1], [0, 0, 1, 1], [], []>} : vector<1x128xf32>, vector<128x64xf32>, vector<1x64xf32> -> vector<1x64xf32>
    %c0_3 = arith.constant 0 : index
    %c0_4 = arith.constant 0 : index
    %3 = vector.load %arg3[%c0_3, %c0_4] : memref<1x64xf32, #tpu.memory_space<vmem>>, vector<1x64xf32>
    tpu.vector_store %arg3[%c0_3, %c0_4], %2 {strides = array<i32>} : memref<1x64xf32, #tpu.memory_space<vmem>>, vector<1x64xf32>,
    return
  }
  func.func @transform_0(%arg0: i32) -> (i32, i32) {
    %c0_i32 = arith.constant 0 : i32
    %c0_i32_0 = arith.constant 0 : i32
    return %arg0, %c0_i32 : i32, i32
  }
  func.func @transform_1(%arg0: i32) -> (i32, i32) {
    %c0_i32 = arith.constant 0 : i32
    %c0_i32_0 = arith.constant 0 : i32
    %c0_i32_1 = arith.constant 0 : i32
    return %c0_i32, %c0_i32_0 : i32, i32
  }
  func.func @transform_2(%arg0: i32) -> (i32, i32) {
    %c0_i32 = arith.constant 0 : i32
    %c0_i32_0 = arith.constant 0 : i32
    return %arg0, %c0_i32 : i32, i32
  }
}

</mosaic_0001>

<llo_original>
// kernel: tpu_custom_call.1
$region0: #{tpu_custom_call.1}
  #allocation0 [shape = 'u32[]', space=smem, size = 0x4, offset = 0x4, fixed_abs, tag = 'smem constant byte address 0x4 - core index']
  #allocation1 [shape = 'u32[144,128]{1,0:T(1,128)}', space=vmem, size = 0x12000, scoped, tag = 'internal scratch']
  %s0 = inlined_call_operand.vmem [shape: f32[1,128], index: 0, kind: input, shape index: {}]
  %s1 = inlined_call_operand.vmem [shape: f32[128,64], index: 1, kind: input, shape index: {}]
  %s2 = inlined_call_operand.hbm [shape: f32[1,64], index: 2, kind: output, shape index: {}]
  %s3 = sld [smem:[#allocation0]]
  $region18: #{tpu_custom_call.1} parent=0
    _
  %s5 = ssub.s32 1, %s3
  %s6 = scalar_select 0, %s5, %s3
  $region1: #{tpu_custom_call.1} parent=0
    #allocation2 [shape = 'u8[512]{0}', space=vmem, size = 0x400, scoped, tag = 'output window, operand 0, single buffered']
    #allocation3 [shape = 's32[1]{0}', space=sflag, size = 0x4, scoped, tag = 'scoped memory for tpu_custom_call.1']
    %7 = vsyncpa [#allocation3], 0
    // Predicated region
    $region2: #{tpu_custom_call.1} parent=1 // pred_check
      _
    $region3: #{tpu_custom_call.1} parent=1 // pred_check_branch
      %9 = sbr.rel (0) target = $region5
    $region4: #{tpu_custom_call.1} parent=1 // pred_region
      _
    $region5: #{tpu_custom_call.1} parent=1 // pred_fallthru
      _
    // Predicated region
    $region6: #{tpu_custom_call.1} parent=1 // pred_check
      _
    $region7: #{tpu_custom_call.1} parent=1 // pred_check_branch
      %11 = sbr.rel (0) target = $region9
    $region8: #{tpu_custom_call.1} parent=1 // pred_region
      _
    $region9: #{tpu_custom_call.1} parent=1 // pred_fallthru
      _
    %v12 = vld [vmem:[%s0] sm:$0x1]
    %v13 = vld [vmem:[%s1] sm:$0xff]
    %v14 = vld [vmem:[%s1 + $0x8] sm:$0xff]
    %v15 = vld [vmem:[%s1 + $0x10] sm:$0xff]
    %v16 = vld [vmem:[%s1 + $0x18] sm:$0xff]
    %v17 = vld [vmem:[%s1 + $0x20] sm:$0xff]
    %v18 = vld [vmem:[%s1 + $0x28] sm:$0xff]
    %v19 = vld [vmem:[%s1 + $0x30] sm:$0xff]
    %v20 = vld [vmem:[%s1 + $0x38] sm:$0xff]
    %v21 = vld [vmem:[%s1 + $0x40] sm:$0xff]
    %v22 = vld [vmem:[%s1 + $0x48] sm:$0xff]
    %v23 = vld [vmem:[%s1 + $0x50] sm:$0xff]
    %v24 = vld [vmem:[%s1 + $0x58] sm:$0xff]
    %v25 = vld [vmem:[%s1 + $0x60] sm:$0xff]
    %v26 = vld [vmem:[%s1 + $0x68] sm:$0xff]
    %v27 = vld [vmem:[%s1 + $0x70] sm:$0xff]
    %v28 = vld [vmem:[%s1 + $0x78] sm:$0xff]
    %29 = vmatprep.subr.mxu0 0.0
    %30 = vmatpush1.msra.mxu0 %v28
    %31 = vmatprep.subr.mxu0 0.0
    %32 = vmatpush1.msra.mxu0 %v27
    %33 = vmatprep.subr.mxu0 0.0
    %34 = vmatpush1.msra.mxu0 %v26
    %35 = vmatprep.subr.mxu0 0.0
    %36 = vmatpush1.msra.mxu0 %v25
    %37 = vmatprep.subr.mxu0 0.0
    %38 = vmatpush1.msra.mxu0 %v24
    %39 = vmatprep.subr.mxu0 0.0
    %40 = vmatpush1.msra.mxu0 %v23
    %41 = vmatprep.subr.mxu0 0.0
    %42 = vmatpush1.msra.mxu0 %v22
    %43 = vmatprep.subr.mxu0 0.0
    %44 = vmatpush1.msra.mxu0 %v21
    %45 = vmatprep.subr.mxu0 0.0
    %46 = vmatpush1.msra.mxu0 %v20
    %47 = vmatprep.subr.mxu0 0.0
    %48 = vmatpush1.msra.mxu0 %v19
    %49 = vmatprep.subr.mxu0 0.0
    %50 = vmatpush1.msra.mxu0 %v18
    %51 = vmatprep.subr.mxu0 0.0
    %52 = vmatpush1.msra.mxu0 %v17
    %53 = vmatprep.subr.mxu0 0.0
    %54 = vmatpush1.msra.mxu0 %v16
    %55 = vmatprep.subr.mxu0 0.0
    %56 = vmatpush1.msra.mxu0 %v15
    %57 = vmatprep.subr.mxu0 0.0
    %58 = vmatpush1.msra.mxu0 %v14
    %59 = vmatprep.subr.mxu0 0.0
    %60 = vmatpush1.msra.mxu0 %v13
    %61 = vmatprep.subr.mxu0 0.0
    %62 = vmatpush2.msra.mxu0 0.0
    %63 = vmatprep.subr.mxu0 0.0
    %64 = vmatpush2.msra.mxu0 0.0
    %65 = vmatprep.subr.mxu0 0.0
    %66 = vmatpush2.msra.mxu0 0.0
    %67 = vmatprep.subr.mxu0 0.0
    %68 = vmatpush2.msra.mxu0 0.0
    %69 = vmatprep.subr.mxu0 0.0
    %70 = vmatpush2.msra.mxu0 0.0
    %71 = vmatprep.subr.mxu0 0.0
    %72 = vmatpush2.msra.mxu0 0.0
    %73 = vmatprep.subr.mxu0 0.0
    %74 = vmatpush2.msra.mxu0 0.0
    %75 = vmatprep.subr.mxu0 0.0
    %76 = vmatpush2.msra.mxu0 0.0
    %77 = vmatprep.subr.mxu0 0.0
    %78 = vmatpush2.msra.mxu0 0.0
    %79 = vmatprep.subr.mxu0 0.0
    %80 = vmatpush2.msra.mxu0 0.0
    %81 = vmatprep.subr.mxu0 0.0
    %82 = vmatpush2.msra.mxu0 0.0
    %83 = vmatprep.subr.mxu0 0.0
    %84 = vmatpush2.msra.mxu0 0.0
    %85 = vmatprep.subr.mxu0 0.0
    %86 = vmatpush2.msra.mxu0 0.0
    %87 = vmatprep.subr.mxu0 0.0
    %88 = vmatpush2.msra.mxu0 0.0
    %89 = vmatprep.subr.mxu0 0.0
    %90 = vmatpush2.msra.mxu0 0.0
    %91 = vmatprep.subr.mxu0 0.0
    %92 = vmatpush2.msra.mxu0 0.0
    %93 = vmatprep.mubr.f32.mxu0 0.0
    %94 = vmatmul.mubr.f32.gmra.mxu0 %v12
    %v95 = vpop.f32.mrf.mxu0
    %v96 = vadd.f32 0.0, %v95
    %v97 = vpop.f32.mrf.mxu0
    %98 = vdwg.mxu0
    %vm99 = vcmask 516096
    %100 = vst.msk [vmem:[#allocation2] sm:$0x1] %vm99, %v96
    // Predicated region
    $region10: #{tpu_custom_call.1} parent=1 // pred_check
      _
    $region11: #{tpu_custom_call.1} parent=1 // pred_check_branch
      %102 = sbr.rel (0) target = $region13
    $region12: #{tpu_custom_call.1} parent=1 // pred_region
      %s104 = ssub.s32 16, 16
      %105 = vsyncadd [#allocation3], %s104
      %s107 = sshll.u32 [#allocation2], 4
      %s108 = int_to_ptr.vmem [resolvable:$true] %s107
      %110 = dma.vmem_to_hbm [thread:$0]  %s108, 16, %s2, [#allocation3]
    $region13: #{tpu_custom_call.1} parent=1 // pred_fallthru
      _
    // Predicated region
    $region14: #{tpu_custom_call.1} parent=1 // pred_check
      _
    $region15: #{tpu_custom_call.1} parent=1 // pred_check_branch
      %112 = sbr.rel (0) target = $region17
    $region16: #{tpu_custom_call.1} parent=1 // pred_region
      %113 = dma.done [#allocation3], 16
    $region17: #{tpu_custom_call.1} parent=1 // pred_fallthru
      _
    %114 = vsyncpa [#allocation3], 1

</llo_original>
